<compile_context>
chip_gen: v6e
topology: v6e:2x2x1
jax: 0.10.0
libtpu: 0.0.40
codegen_flags: <defaults>
</compile_context>

<pallas_src>
import functools
import math

import jax
import jax.numpy as jnp
from jax.experimental import pallas as pl
from jax.experimental.pallas import tpu as pltpu

_NUM_FEAT = 10   # [T, V, E, CFLA, CFK, CALA, CBK, VF, VA, VB]
_NUM_PASS = 3    # T, V, E: pure passthrough, bypass the kernel
_NUM_DYN = 7     # [CFLA, CFK, CALA, CBK, VF, VA, VB]
_NUM_MOL = 4     # [JLA, JK, JVA, JVB]
_LANES = 128


def _round_up(x, m):
    return ((x + m - 1) // m) * m


def _pick_tile_rows(r, block_rows):
    """Largest multiple-of-8 divisor of r that is <= ~block_rows (r % 8 == 0)."""
    cap = min(r, _round_up(block_rows, 8))
    tr = cap - (cap % 8)
    while tr > 8 and r % tr:
        tr -= 8
    return tr


def _physics_kernel(mol_ref, dyn_ref, out_ref, *, time_step):
    """Mass-balance / volume-update physics on one lane-dense tile.

    mol_ref: (4, TR, 128) f32   [JLA, JK, JVA, JVB]
    dyn_ref: (7, TR, 128) f32   [CFLA, CFK, CALA, CBK, VF, VA, VB]
    out_ref: (7, TR, 128) f32   [nCFLA, nCFK, nCALA, nCBK, nVF, nVA, nVB]
    """
    ts = jnp.float32(time_step)
    eps = jnp.float32(1e-6)

    # Fluxes scaled by the time step.
    dLA = mol_ref[0] * ts
    dK = mol_ref[1] * ts
    dVA = mol_ref[2] * ts
    dVB = mol_ref[3] * ts

    # Old volumes.
    VF = dyn_ref[4]
    VA = dyn_ref[5]
    VB = dyn_ref[6]

    # Volume update -- stored immediately to keep live ranges short.
    nVF = VF - dVA - dVB
    nVA = VA + dVA
    nVB = VB + dVB
    out_ref[4] = nVF
    out_ref[5] = nVA
    out_ref[6] = nVB

    # Concentration update: moles = conc * old volume, +/- flux, / new volume.
    # Each (exact) reciprocal is computed right before the stores that use it.
    rF = pl.reciprocal(nVF + eps, approx=False)
    out_ref[0] = (dyn_ref[0] * VF - dLA) * rF
    out_ref[1] = (dyn_ref[1] * VF - dK) * rF
    rA = pl.reciprocal(nVA + eps, approx=False)
    out_ref[2] = (dyn_ref[2] * VA + dLA) * rA
    rB = pl.reciprocal(nVB + eps, approx=False)
    out_ref[3] = (dyn_ref[3] * VB + dK) * rB


@functools.partial(jax.jit, static_argnames=("time_step", "block_rows"))
def physics_layer_channel_major(mol_cm, dyn_cm, *, time_step=0.1, block_rows=1024):
    """Core kernel on channel-major, lane-dense data (no wrapper layout passes).

    mol_cm: (4, R, 128) f32, dyn_cm: (7, R, 128) f32 with R % 8 == 0.
    Returns the updated 7 dynamic channels, shape (7, R, 128) f32.
    """
    assert mol_cm.ndim == 3 and mol_cm.shape[0] == _NUM_MOL and mol_cm.shape[2] == _LANES
    assert dyn_cm.ndim == 3 and dyn_cm.shape[0] == _NUM_DYN and dyn_cm.shape[2] == _LANES
    r = dyn_cm.shape[1]
    assert mol_cm.shape[1] == r and r % 8 == 0

    mol_cm = mol_cm.astype(jnp.float32)
    dyn_cm = dyn_cm.astype(jnp.float32)

    tr = _pick_tile_rows(r, block_rows)
    g = r // tr

    kernel = functools.partial(_physics_kernel, time_step=time_step)

    return pl.pallas_call(
        kernel,
        out_shape=jax.ShapeDtypeStruct((_NUM_DYN, r, _LANES), jnp.float32),
        grid_spec=pltpu.PrefetchScalarGridSpec(
            num_scalar_prefetch=0,
            grid=(g,),
            in_specs=[
                pl.BlockSpec((_NUM_MOL, tr, _LANES), lambda j: (0, j, 0)),
                pl.BlockSpec((_NUM_DYN, tr, _LANES), lambda j: (0, j, 0)),
            ],
            out_specs=pl.BlockSpec((_NUM_DYN, tr, _LANES), lambda j: (0, j, 0)),
        ),
        # Reuse the dynamic-features buffer as the output buffer; safe because
        # every output channel of the block is fully written each grid step.
        input_output_aliases={1: 0},
        # TODO(synk): on v7x, pltpu.CORE_PARALLEL (or a core_map leading axis of
        # size 2) would explicitly shard the grid across both TensorCores; kept
        # "parallel" here for portability across v5e/v6e/v7x.
        compiler_params=pltpu.CompilerParams(
            dimension_semantics=("parallel",),
            vmem_limit_bytes=32 * 1024 * 1024,
        ),
    )(mol_cm, dyn_cm)


@functools.partial(jax.jit, static_argnames=("time_step", "block_rows"))
def physics_layer(mol_changes, features, *, time_step=0.1, block_rows=1024):
    """Drop-in equivalent of PhysicsLayer.forward.

    mol_changes: (..., 4) float, features: (..., 10) float.
    Returns new_states: (..., 10) float32.
    """
    assert mol_changes.shape[-1] == _NUM_MOL
    assert features.shape[-1] == _NUM_FEAT
    lead_shape = features.shape[:-1]
    assert mol_changes.shape[:-1] == lead_shape

    n = math.prod(lead_shape) if lead_shape else 1

    feat = features.astype(jnp.float32)
    mol2d = mol_changes.reshape(-1, _NUM_MOL).astype(jnp.float32)
    dyn2d = feat.reshape(-1, _NUM_FEAT)[:, _NUM_PASS:]   # drop T/V/E passthrough

    # Pad row count to g * tr * 128 so every kernel block is a dense
    # (8,128)-tiled slab; only split the grid when the data actually exceeds
    # one block_rows-sized tile.
    r_total = max(pl.cdiv(n, _LANES), 1)
    g = pl.cdiv(r_total, block_rows)
    tr = _round_up(pl.cdiv(r_total, g), 8)
    r_pad = g * tr
    n_pad = r_pad * _LANES

    pad = n_pad - n
    if pad:
        mol2d = jnp.pad(mol2d, ((0, pad), (0, 0)))
        dyn2d = jnp.pad(dyn2d, ((0, pad), (0, 0)))

    # Channel-major, lane-dense layout: one fused slice+pad+transpose copy per
    # operand on the way in.
    mol_cm = mol2d.T.reshape(_NUM_MOL, r_pad, _LANES)
    dyn_cm = dyn2d.T.reshape(_NUM_DYN, r_pad, _LANES)

    out_cm = physics_layer_channel_major(
        mol_cm, dyn_cm, time_step=time_step, block_rows=block_rows)

    out_dyn = out_cm.reshape(_NUM_DYN, n_pad).T[:n].reshape(*lead_shape, _NUM_DYN)
    # Splice the untouched passthrough channels back in with a single concat.
    return jnp.concatenate([feat[..., :_NUM_PASS], out_dyn], axis=-1)


def _reference(mol_changes, features, time_step=0.1):
    """Pure-JAX reference mirroring the PyTorch forward, for validation."""
    f = features
    m = mol_changes
    T, V, E = f[..., 0:1], f[..., 1:2], f[..., 2:3]
    CFLA, CFK, CALA, CBK = f[..., 3:4], f[..., 4:5], f[..., 5:6], f[..., 6:7]
    VF, VA, VB = f[..., 7:8], f[..., 8:9], f[..., 9:10]
    NFLA, NFK, NALA, NBK = CFLA * VF, CFK * VF, CALA * VA, CBK * VB
    JLA, JK, JVA, JVB = m[..., 0:1], m[..., 1:2], m[..., 2:3], m[..., 3:4]
    dLA, dK, dVA, dVB = (JLA * time_step, JK * time_step,
                         JVA * time_step, JVB * time_step)
    nVF, nVA, nVB = VF - dVA - dVB, VA + dVA, VB + dVB
    nNFLA, nNFK, nNALA, nNBK = NFLA - dLA, NFK - dK, NALA + dLA, NBK + dK
    eps = 1e-6
    nCFLA, nCFK = nNFLA / (nVF + eps), nNFK / (nVF + eps)
    nCALA, nCBK = nNALA / (nVA + eps), nNBK / (nVB + eps)
    return jnp.concatenate(
        [T, V, E, nCFLA, nCFK, nCALA, nCBK, nVF, nVA, nVB], axis=-1
    )


if __name__ == "__main__":
    key = jax.random.PRNGKey(0)
    k1, k2, k3, k4 = jax.random.split(key, 4)

    # --- Row-major (drop-in) path: batch=2, seq=8, mol=4, features=10 ---
    batch, seq = 2, 8
    mol_changes = jax.random.normal(k1, (batch, seq, _NUM_MOL), dtype=jnp.float32)
    # Positive-ish physical features (concentrations, volumes) keep division sane.
    features = jax.random.uniform(
        k2, (batch, seq, _NUM_FEAT), dtype=jnp.float32, minval=0.1, maxval=2.0
    )
    out = jax.block_until_ready(physics_layer(mol_changes, features, time_step=0.1))
    ref = _reference(mol_changes, features, time_step=0.1)
    assert out.shape == (batch, seq, _NUM_FEAT)
    assert jnp.allclose(out, ref, atol=1e-5, rtol=1e-5), "row-major path mismatch"

    # --- Channel-major fast path (no wrapper layout passes): R=8 row-groups ---
    r = 8
    mol_cm = jax.random.normal(k3, (_NUM_MOL, r, _LANES), dtype=jnp.float32)
    dyn_cm = jax.random.uniform(
        k4, (_NUM_DYN, r, _LANES), dtype=jnp.float32, minval=0.1, maxval=2.0
    )
    out_cm = jax.block_until_ready(
        physics_layer_channel_major(mol_cm, dyn_cm, time_step=0.1))
    mol_rm = mol_cm.reshape(_NUM_MOL, -1).T
    feat_rm = jnp.concatenate(
        [jnp.zeros((r * _LANES, _NUM_PASS), jnp.float32),
         dyn_cm.reshape(_NUM_DYN, -1).T], axis=-1)
    ref_cm = _reference(mol_rm, feat_rm, time_step=0.1)[:, _NUM_PASS:]
    assert jnp.allclose(out_cm.reshape(_NUM_DYN, -1).T, ref_cm,
                        atol=1e-5, rtol=1e-5), "channel-major path mismatch"

    print("KERNEL_OK")
</pallas_src>

<mosaic_0001>
module attributes {stable_mosaic.version = 11 : i64} {
  func.func @_physics_kernel(%arg0: i32, %arg1: memref<4x8x128xf32, #tpu.memory_space<vmem>>, %arg2: memref<7x8x128xf32, #tpu.memory_space<vmem>>, %arg3: memref<7x8x128xf32, #tpu.memory_space<vmem>>) attributes {dimension_semantics = [#tpu.dimension_semantics<parallel>], iteration_bounds = array<i64: 1>, scalar_prefetch = 0 : i64, scratch_operands = 0 : i64, tpu.core_type = #tpu.core_type<tc>, window_params = [{transform_indices = @transform_0, window_bounds = array<i64: 4, 8, 128>}, {transform_indices = @transform_1, window_bounds = array<i64: 7, 8, 128>}, {transform_indices = @transform_2, window_bounds = array<i64: 7, 8, 128>}]} {
    %c0 = arith.constant 0 : index
    %c0_0 = arith.constant 0 : index
    %c0_1 = arith.constant 0 : index
    %0 = vector.load %arg1[%c0, %c0_0, %c0_1] : memref<4x8x128xf32, #tpu.memory_space<vmem>>, vector<1x8x128xf32>
    %1 = vector.shape_cast %0 : vector<1x8x128xf32> to vector<8x128xf32>
    %cst = arith.constant 1.000000e-01 : f32
    %2 = vector.broadcast %cst : f32 to vector<8x128xf32>
    %3 = arith.mulf %1, %2 : vector<8x128xf32>
    %c1 = arith.constant 1 : index
    %c0_2 = arith.constant 0 : index
    %c0_3 = arith.constant 0 : index
    %4 = vector.load %arg1[%c1, %c0_2, %c0_3] : memref<4x8x128xf32, #tpu.memory_space<vmem>>, vector<1x8x128xf32>
    %5 = vector.shape_cast %4 : vector<1x8x128xf32> to vector<8x128xf32>
    %cst_4 = arith.constant 1.000000e-01 : f32
    %6 = vector.broadcast %cst_4 : f32 to vector<8x128xf32>
    %7 = arith.mulf %5, %6 : vector<8x128xf32>
    %c2 = arith.constant 2 : index
    %c0_5 = arith.constant 0 : index
    %c0_6 = arith.constant 0 : index
    %8 = vector.load %arg1[%c2, %c0_5, %c0_6] : memref<4x8x128xf32, #tpu.memory_space<vmem>>, vector<1x8x128xf32>
    %9 = vector.shape_cast %8 : vector<1x8x128xf32> to vector<8x128xf32>
    %cst_7 = arith.constant 1.000000e-01 : f32
    %10 = vector.broadcast %cst_7 : f32 to vector<8x128xf32>
    %11 = arith.mulf %9, %10 : vector<8x128xf32>
    %c3 = arith.constant 3 : index
    %c0_8 = arith.constant 0 : index
    %c0_9 = arith.constant 0 : index
    %12 = vector.load %arg1[%c3, %c0_8, %c0_9] : memref<4x8x128xf32, #tpu.memory_space<vmem>>, vector<1x8x128xf32>
    %13 = vector.shape_cast %12 : vector<1x8x128xf32> to vector<8x128xf32>
    %cst_10 = arith.constant 1.000000e-01 : f32
    %14 = vector.broadcast %cst_10 : f32 to vector<8x128xf32>
    %15 = arith.mulf %13, %14 : vector<8x128xf32>
    %c4 = arith.constant 4 : index
    %c0_11 = arith.constant 0 : index
    %c0_12 = arith.constant 0 : index
    %16 = vector.load %arg2[%c4, %c0_11, %c0_12] : memref<7x8x128xf32, #tpu.memory_space<vmem>>, vector<1x8x128xf32>
    %17 = vector.shape_cast %16 : vector<1x8x128xf32> to vector<8x128xf32>
    %c5 = arith.constant 5 : index
    %c0_13 = arith.constant 0 : index
    %c0_14 = arith.constant 0 : index
    %18 = vector.load %arg2[%c5, %c0_13, %c0_14] : memref<7x8x128xf32, #tpu.memory_space<vmem>>, vector<1x8x128xf32>
    %19 = vector.shape_cast %18 : vector<1x8x128xf32> to vector<8x128xf32>
    %c6 = arith.constant 6 : index
    %c0_15 = arith.constant 0 : index
    %c0_16 = arith.constant 0 : index
    %20 = vector.load %arg2[%c6, %c0_15, %c0_16] : memref<7x8x128xf32, #tpu.memory_space<vmem>>, vector<1x8x128xf32>
    %21 = vector.shape_cast %20 : vector<1x8x128xf32> to vector<8x128xf32>
    %22 = arith.subf %17, %11 : vector<8x128xf32>
    %23 = arith.subf %22, %15 : vector<8x128xf32>
    %24 = arith.addf %19, %11 : vector<8x128xf32>
    %25 = arith.addf %21, %15 : vector<8x128xf32>
    %c4_17 = arith.constant 4 : index
    %c0_18 = arith.constant 0 : index
    %c0_19 = arith.constant 0 : index
    %26 = vector.load %arg3[%c4_17, %c0_18, %c0_19] : memref<7x8x128xf32, #tpu.memory_space<vmem>>, vector<1x8x128xf32>
    %27 = vector.shape_cast %26 : vector<1x8x128xf32> to vector<8x128xf32>
    %28 = vector.shape_cast %23 : vector<8x128xf32> to vector<1x8x128xf32>
    tpu.vector_store %arg3[%c4_17, %c0_18, %c0_19], %28 {strides = array<i32>} : memref<7x8x128xf32, #tpu.memory_space<vmem>>, vector<1x8x128xf32>,
    %c5_20 = arith.constant 5 : index
    %c0_21 = arith.constant 0 : index
    %c0_22 = arith.constant 0 : index
    %29 = vector.load %arg3[%c5_20, %c0_21, %c0_22] : memref<7x8x128xf32, #tpu.memory_space<vmem>>, vector<1x8x128xf32>
    %30 = vector.shape_cast %29 : vector<1x8x128xf32> to vector<8x128xf32>
    %31 = vector.shape_cast %24 : vector<8x128xf32> to vector<1x8x128xf32>
    tpu.vector_store %arg3[%c5_20, %c0_21, %c0_22], %31 {strides = array<i32>} : memref<7x8x128xf32, #tpu.memory_space<vmem>>, vector<1x8x128xf32>,
    %c6_23 = arith.constant 6 : index
    %c0_24 = arith.constant 0 : index
    %c0_25 = arith.constant 0 : index
    %32 = vector.load %arg3[%c6_23, %c0_24, %c0_25] : memref<7x8x128xf32, #tpu.memory_space<vmem>>, vector<1x8x128xf32>
    %33 = vector.shape_cast %32 : vector<1x8x128xf32> to vector<8x128xf32>
    %34 = vector.shape_cast %25 : vector<8x128xf32> to vector<1x8x128xf32>
    tpu.vector_store %arg3[%c6_23, %c0_24, %c0_25], %34 {strides = array<i32>} : memref<7x8x128xf32, #tpu.memory_space<vmem>>, vector<1x8x128xf32>,
    %cst_26 = arith.constant 9.99999997E-7 : f32
    %35 = vector.broadcast %cst_26 : f32 to vector<8x128xf32>
    %36 = arith.addf %23, %35 : vector<8x128xf32>
    %37 = tpu.reciprocal %36 : vector<8x128xf32> -> vector<8x128xf32>
    %c0_27 = arith.constant 0 : index
    %c0_28 = arith.constant 0 : index
    %c0_29 = arith.constant 0 : index
    %38 = vector.load %arg2[%c0_27, %c0_28, %c0_29] : memref<7x8x128xf32, #tpu.memory_space<vmem>>, vector<1x8x128xf32>
    %39 = vector.shape_cast %38 : vector<1x8x128xf32> to vector<8x128xf32>
    %40 = arith.mulf %39, %17 : vector<8x128xf32>
    %41 = arith.subf %40, %3 : vector<8x128xf32>
    %42 = arith.mulf %41, %37 : vector<8x128xf32>
    %c0_30 = arith.constant 0 : index
    %c0_31 = arith.constant 0 : index
    %c0_32 = arith.constant 0 : index
    %43 = vector.load %arg3[%c0_30, %c0_31, %c0_32] : memref<7x8x128xf32, #tpu.memory_space<vmem>>, vector<1x8x128xf32>
    %44 = vector.shape_cast %43 : vector<1x8x128xf32> to vector<8x128xf32>
    %45 = vector.shape_cast %42 : vector<8x128xf32> to vector<1x8x128xf32>
    tpu.vector_store %arg3[%c0_30, %c0_31, %c0_32], %45 {strides = array<i32>} : memref<7x8x128xf32, #tpu.memory_space<vmem>>, vector<1x8x128xf32>,
    %c1_33 = arith.constant 1 : index
    %c0_34 = arith.constant 0 : index
    %c0_35 = arith.constant 0 : index
    %46 = vector.load %arg2[%c1_33, %c0_34, %c0_35] : memref<7x8x128xf32, #tpu.memory_space<vmem>>, vector<1x8x128xf32>
    %47 = vector.shape_cast %46 : vector<1x8x128xf32> to vector<8x128xf32>
    %48 = arith.mulf %47, %17 : vector<8x128xf32>
    %49 = arith.subf %48, %7 : vector<8x128xf32>
    %50 = arith.mulf %49, %37 : vector<8x128xf32>
    %c1_36 = arith.constant 1 : index
    %c0_37 = arith.constant 0 : index
    %c0_38 = arith.constant 0 : index
    %51 = vector.load %arg3[%c1_36, %c0_37, %c0_38] : memref<7x8x128xf32, #tpu.memory_space<vmem>>, vector<1x8x128xf32>
    %52 = vector.shape_cast %51 : vector<1x8x128xf32> to vector<8x128xf32>
    %53 = vector.shape_cast %50 : vector<8x128xf32> to vector<1x8x128xf32>
    tpu.vector_store %arg3[%c1_36, %c0_37, %c0_38], %53 {strides = array<i32>} : memref<7x8x128xf32, #tpu.memory_space<vmem>>, vector<1x8x128xf32>,
    %cst_39 = arith.constant 9.99999997E-7 : f32
    %54 = vector.broadcast %cst_39 : f32 to vector<8x128xf32>
    %55 = arith.addf %24, %54 : vector<8x128xf32>
    %56 = tpu.reciprocal %55 : vector<8x128xf32> -> vector<8x128xf32>
    %c2_40 = arith.constant 2 : index
    %c0_41 = arith.constant 0 : index
    %c0_42 = arith.constant 0 : index
    %57 = vector.load %arg2[%c2_40, %c0_41, %c0_42] : memref<7x8x128xf32, #tpu.memory_space<vmem>>, vector<1x8x128xf32>
    %58 = vector.shape_cast %57 : vector<1x8x128xf32> to vector<8x128xf32>
    %59 = arith.mulf %58, %19 : vector<8x128xf32>
    %60 = arith.addf %59, %3 : vector<8x128xf32>
    %61 = arith.mulf %60, %56 : vector<8x128xf32>
    %c2_43 = arith.constant 2 : index
    %c0_44 = arith.constant 0 : index
    %c0_45 = arith.constant 0 : index
    %62 = vector.load %arg3[%c2_43, %c0_44, %c0_45] : memref<7x8x128xf32, #tpu.memory_space<vmem>>, vector<1x8x128xf32>
    %63 = vector.shape_cast %62 : vector<1x8x128xf32> to vector<8x128xf32>
    %64 = vector.shape_cast %61 : vector<8x128xf32> to vector<1x8x128xf32>
    tpu.vector_store %arg3[%c2_43, %c0_44, %c0_45], %64 {strides = array<i32>} : memref<7x8x128xf32, #tpu.memory_space<vmem>>, vector<1x8x128xf32>,
    %cst_46 = arith.constant 9.99999997E-7 : f32
    %65 = vector.broadcast %cst_46 : f32 to vector<8x128xf32>
    %66 = arith.addf %25, %65 : vector<8x128xf32>
    %67 = tpu.reciprocal %66 : vector<8x128xf32> -> vector<8x128xf32>
    %c3_47 = arith.constant 3 : index
    %c0_48 = arith.constant 0 : index
    %c0_49 = arith.constant 0 : index
    %68 = vector.load %arg2[%c3_47, %c0_48, %c0_49] : memref<7x8x128xf32, #tpu.memory_space<vmem>>, vector<1x8x128xf32>
    %69 = vector.shape_cast %68 : vector<1x8x128xf32> to vector<8x128xf32>
    %70 = arith.mulf %69, %21 : vector<8x128xf32>
    %71 = arith.addf %70, %7 : vector<8x128xf32>
    %72 = arith.mulf %71, %67 : vector<8x128xf32>
    %c3_50 = arith.constant 3 : index
    %c0_51 = arith.constant 0 : index
    %c0_52 = arith.constant 0 : index
    %73 = vector.load %arg3[%c3_50, %c0_51, %c0_52] : memref<7x8x128xf32, #tpu.memory_space<vmem>>, vector<1x8x128xf32>
    %74 = vector.shape_cast %73 : vector<1x8x128xf32> to vector<8x128xf32>
    %75 = vector.shape_cast %72 : vector<8x128xf32> to vector<1x8x128xf32>
    tpu.vector_store %arg3[%c3_50, %c0_51, %c0_52], %75 {strides = array<i32>} : memref<7x8x128xf32, #tpu.memory_space<vmem>>, vector<1x8x128xf32>,
    return
  }
  func.func @transform_0(%arg0: i32) -> (i32, i32, i32) {
    %c0_i32 = arith.constant 0 : i32
    %c0_i32_0 = arith.constant 0 : i32
    %c0_i32_1 = arith.constant 0 : i32
    return %c0_i32, %arg0, %c0_i32_0 : i32, i32, i32
  }
  func.func @transform_1(%arg0: i32) -> (i32, i32, i32) {
    %c0_i32 = arith.constant 0 : i32
    %c0_i32_0 = arith.constant 0 : i32
    %c0_i32_1 = arith.constant 0 : i32
    return %c0_i32, %arg0, %c0_i32_0 : i32, i32, i32
  }
  func.func @transform_2(%arg0: i32) -> (i32, i32, i32) {
    %c0_i32 = arith.constant 0 : i32
    %c0_i32_0 = arith.constant 0 : i32
    %c0_i32_1 = arith.constant 0 : i32
    return %c0_i32, %arg0, %c0_i32_0 : i32, i32, i32
  }
}

</mosaic_0001>

<llo_original>
// kernel: physics_layer_channel_major.1
$region0: #{physics_layer_channel_major.1}
  #allocation0 [shape = 'u32[]', space=smem, size = 0x4, offset = 0x4, fixed_abs, tag = 'smem constant byte address 0x4 - core index']
  #allocation1 [shape = 'u32[144,128]{1,0:T(1,128)}', space=vmem, size = 0x12000, scoped, tag = 'internal scratch']
  %s0 = inlined_call_operand.vmem [shape: f32[4,8,128], index: 0, kind: input, shape index: {}]
  %s1 = inlined_call_operand.hbm [shape: f32[7,8,128], index: 1, kind: input, shape index: {}, may-alias: {1,2}]
  %s2 = inlined_call_operand.hbm [shape: f32[7,8,128], index: 2, kind: output, shape index: {}, may-alias: {1,2}]
  %s3 = sld [smem:[#allocation0]]
  $region22: #{physics_layer_channel_major.1} parent=0
    _
  %s5 = ssub.s32 1, %s3
  %s6 = scalar_select 0, %s5, %s3
  $region1: #{physics_layer_channel_major.1} parent=0
    #allocation2 [shape = 'u8[28672]{0}', space=vmem, size = 0x7000, scoped, tag = 'input window, operand 1, single buffered']
    #allocation3 [shape = 's32[1]{0}', space=sflag, size = 0x4, scoped, tag = 'scoped memory for physics_layer_channel_major.1']
    #allocation4 [shape = 's32[1]{0}', space=sflag, size = 0x4, scoped, tag = 'scoped memory for physics_layer_channel_major.1']
    #allocation5 [shape = 'u8[28672]{0}', space=vmem, size = 0x7000, scoped, tag = 'output window, operand 0, single buffered']
    %7 = vsyncpa [#allocation3], 0
    %8 = vsyncpa [#allocation4], 0
    // Predicated region
    $region2: #{physics_layer_channel_major.1} parent=1 // pred_check
      _
    $region3: #{physics_layer_channel_major.1} parent=1 // pred_check_branch
      %10 = sbr.rel (0) target = $region5
    $region4: #{physics_layer_channel_major.1} parent=1 // pred_region
      _
    $region5: #{physics_layer_channel_major.1} parent=1 // pred_fallthru
      _
    // Predicated region
    $region6: #{physics_layer_channel_major.1} parent=1 // pred_check
      _
    $region7: #{physics_layer_channel_major.1} parent=1 // pred_check_branch
      %12 = sbr.rel (0) target = $region9
    $region8: #{physics_layer_channel_major.1} parent=1 // pred_region
      %s14 = ssub.s32 896, 896
      %15 = vsyncadd [#allocation3], %s14
      %s16 = sshll.u32 [#allocation2], 4
      %s17 = int_to_ptr.vmem [resolvable:$true] %s16
      %22 = dma.hbm_to_vmem [thread:$0]  %s1, 896, %s17, [#allocation3], 128, 128, 8
    $region9: #{physics_layer_channel_major.1} parent=1 // pred_fallthru
      _
    // Predicated region
    $region10: #{physics_layer_channel_major.1} parent=1 // pred_check
      _
    $region11: #{physics_layer_channel_major.1} parent=1 // pred_check_branch
      %24 = sbr.rel (0) target = $region13
    $region12: #{physics_layer_channel_major.1} parent=1 // pred_region
      %25 = dma.done [#allocation3], 896
    $region13: #{physics_layer_channel_major.1} parent=1 // pred_fallthru
      _
    %v26 = vld [vmem:[%s0] sm:$0xff]
    %v27 = vmul.f32 %v26, 0.1
    %s28 = scalar_lea.vmem %s0, 8
    %v29 = vld [vmem:[%s28] sm:$0xff]
    %v30 = vmul.f32 %v29, 0.1
    %s31 = scalar_lea.vmem %s0, 16
    %v32 = vld [vmem:[%s31] sm:$0xff]
    %v33 = vmul.f32 %v32, 0.1
    %s34 = scalar_lea.vmem %s0, 24
    %v35 = vld [vmem:[%s34] sm:$0xff]
    %v36 = vmul.f32 %v35, 0.1
    %s37 = scalar_lea.vmem [#allocation2], 32
    %v38 = vld [vmem:[%s37] sm:$0xff]
    %s39 = scalar_lea.vmem [#allocation2], 40
    %v40 = vld [vmem:[%s39] sm:$0xff]
    %s41 = scalar_lea.vmem [#allocation2], 48
    %v42 = vld [vmem:[%s41] sm:$0xff]
    %v43 = vsub.f32 %v38, %v33
    %v44 = vsub.f32 %v43, %v36
    %v45 = vadd.f32 %v40, %v33
    %v46 = vadd.f32 %v42, %v36
    %s47 = scalar_lea.vmem [#allocation5], 32
    %48 = vst [vmem:[%s47] sm:$0xff] %v44
    %s49 = scalar_lea.vmem [#allocation5], 40
    %50 = vst [vmem:[%s49] sm:$0xff] %v45
    %s51 = scalar_lea.vmem [#allocation5], 48
    %52 = vst [vmem:[%s51] sm:$0xff] %v46
    %v53 = vadd.f32 %v44, 1e-06
    %v54 = vrcp.pop %v53
    %v55 = vld [vmem:[#allocation2] sm:$0xff]
    %v56 = vmul.f32 %v55, %v38
    %v57 = vsub.f32 %v56, %v27
    %v58 = vmul.f32 %v57, %v54
    %59 = vst [vmem:[#allocation5] sm:$0xff] %v58
    %s60 = scalar_lea.vmem [#allocation2], 8
    %v61 = vld [vmem:[%s60] sm:$0xff]
    %v62 = vmul.f32 %v61, %v38
    %v63 = vsub.f32 %v62, %v30
    %v64 = vmul.f32 %v63, %v54
    %s65 = scalar_lea.vmem [#allocation5], 8
    %66 = vst [vmem:[%s65] sm:$0xff] %v64
    %v67 = vadd.f32 %v45, 1e-06
    %v68 = vrcp.pop %v67
    %s69 = scalar_lea.vmem [#allocation2], 16
    %v70 = vld [vmem:[%s69] sm:$0xff]
    %v71 = vmul.f32 %v70, %v40
    %v72 = vadd.f32 %v71, %v27
    %v73 = vmul.f32 %v72, %v68
    %s74 = scalar_lea.vmem [#allocation5], 16
    %75 = vst [vmem:[%s74] sm:$0xff] %v73
    %v76 = vadd.f32 %v46, 1e-06
    %v77 = vrcp.pop %v76
    %s78 = scalar_lea.vmem [#allocation2], 24
    %v79 = vld [vmem:[%s78] sm:$0xff]
    %v80 = vmul.f32 %v79, %v42
    %v81 = vadd.f32 %v80, %v30
    %v82 = vmul.f32 %v81, %v77
    %s83 = scalar_lea.vmem [#allocation5], 24
    %84 = vst [vmem:[%s83] sm:$0xff] %v82
    // Predicated region
    $region14: #{physics_layer_channel_major.1} parent=1 // pred_check
      _
    $region15: #{physics_layer_channel_major.1} parent=1 // pred_check_branch
      %86 = sbr.rel (0) target = $region17
    $region16: #{physics_layer_channel_major.1} parent=1 // pred_region
      %s88 = ssub.s32 896, 896
      %89 = vsyncadd [#allocation4], %s88
      %s90 = sshll.u32 [#allocation5], 4
      %s91 = int_to_ptr.vmem [resolvable:$true] %s90
      %96 = dma.vmem_to_hbm [thread:$0]  %s91, 896, %s2, [#allocation4], 128, 128, 8
    $region17: #{physics_layer_channel_major.1} parent=1 // pred_fallthru
      _
    // Predicated region
    $region18: #{physics_layer_channel_major.1} parent=1 // pred_check
      _
    $region19: #{physics_layer_channel_major.1} parent=1 // pred_check_branch
      %98 = sbr.rel (0) target = $region21
    $region20: #{physics_layer_channel_major.1} parent=1 // pred_region
      %99 = dma.done [#allocation4], 896
    $region21: #{physics_layer_channel_major.1} parent=1 // pred_fallthru
      _
    %100 = vsyncpa [#allocation3], 1
    %101 = vsyncpa [#allocation4], 1

</llo_original>
